<compile_context>
chip_gen: v7x
topology: tpu7x:2x2x1
jax: 0.10.0
libtpu: 0.0.40
codegen_flags: <defaults>
</compile_context>

<pallas_src>
import functools
from typing import NamedTuple

import numpy as np
import jax
import jax.numpy as jnp
from jax.experimental import pallas as pl
from jax.experimental.pallas import tpu as pltpu


def _round_up(x: int, m: int) -> int:
    return ((x + m - 1) // m) * m


def _pad_to(a, target_shape):
    pads = tuple((0, t - s) for s, t in zip(a.shape, target_shape))
    if all(p == (0, 0) for p in pads):
        return a
    return jnp.pad(a, pads)


# --------------------------------------------------------------------------- kernels

def _ffn_kernel_resident(x_ref, w1_ref, b1_ref, w2_ref, b2_ref, o_ref):
    """Single hidden chunk: weights VMEM-resident, no accumulator scratch."""
    # Layer 1: (TM, Kp) @ (Kp, Hp) + b1, ReLU.
    h = jnp.dot(x_ref[...], w1_ref[...], preferred_element_type=jnp.float32)
    h = jnp.maximum(h + b1_ref[...], 0.0)
    # dropout: module default dropout_rate=0 (eval semantics) -> identity.
    # TODO(synk): training-mode dropout with p>0 would use pltpu.prng_seed/prng_random_bits.
    # Layer 2 straight into the output tile (no scratch, no extra VPU/vst passes).
    o_ref[...] = (jnp.dot(h.astype(w2_ref.dtype), w2_ref[...],
                          preferred_element_type=jnp.float32)
                  + b2_ref[...]).astype(o_ref.dtype)


def _ffn_kernel_chunked(x_ref, w1_ref, b1_ref, w2_ref, b2_ref, o_ref, acc_ref):
    """Hidden dimension split into chunks; partial layer-2 sums accumulated in f32."""
    k = pl.program_id(1)

    h = jnp.dot(x_ref[...], w1_ref[...], preferred_element_type=jnp.float32)
    h = jnp.maximum(h + b1_ref[...], 0.0)
    partial = jnp.dot(h.astype(w2_ref.dtype), w2_ref[...],
                      preferred_element_type=jnp.float32)

    @pl.when(k == 0)
    def _first():
        acc_ref[...] = partial          # overwrite: no separate zero-init pass

    @pl.when(k != 0)
    def _accumulate():
        acc_ref[...] += partial

    @pl.when(k == pl.num_programs(1) - 1)
    def _finalize():
        o_ref[...] = (acc_ref[...] + b2_ref[...]).astype(o_ref.dtype)


# --------------------------------------------------------------------------- budgeting

def _vmem_capacity_bytes() -> int:
    try:
        cap = int(getattr(pltpu.get_tpu_info(), "vmem_capacity_bytes", 0))
        if cap > 0:
            return cap
    except Exception:
        pass
    return 64 << 20  # conservative: v7x per-TensorCore VMEM


def _vmem_budget_bytes() -> int:
    return int(_vmem_capacity_bytes() * 0.7)


def _footprint_bytes(tm, hk, kp, npad, x_item, w_item, out_item, chunked):
    buf = 2  # BlockSpec double-buffering
    x_tile = buf * tm * kp * x_item
    w1 = buf * kp * hk * w_item
    w2 = buf * hk * npad * w_item
    bias = buf * (hk + npad) * 4
    out = buf * tm * npad * out_item
    h_tmp = tm * hk * 4                       # f32 layer-1 intermediate
    acc = tm * npad * 4 if chunked else 0
    return x_tile + w1 + w2 + bias + out + h_tmp + acc


def _vmem_limit_bytes(footprint: int) -> int:
    cap = _vmem_capacity_bytes()
    want = max(int(footprint * 1.5) + (4 << 20), 32 << 20)
    return int(min(want, int(cap * 0.9)))


def _select_tiles(m, kp, hp, npad, x_item, w_item, out_item, budget,
                  block_m=None, block_h=None):
    """Pick (row tile tm, hidden chunk hk).  Priority: weight residency (hk == hp),
    then large tm with the biggest hidden chunk that fits."""
    m8 = _round_up(max(m, 1), 8)
    if block_m is not None:
        tms = [min(_round_up(block_m, 8), m8)]
    else:
        base = {min(c, m8) for c in (512, 256, 128, 64, 32, 16, 8)}
        if m8 >= 2048:
            base.add(1024)          # big row tiles only when there are >= 2 of them
        tms = sorted(base, reverse=True)
    if block_h is not None:
        hks = [min(_round_up(block_h, 128), hp)]
    else:
        hks = [hp] + [c for c in (2048, 1024, 512, 256, 128) if c < hp]

    def fits(tm, hk):
        return _footprint_bytes(tm, hk, kp, npad, x_item, w_item, out_item,
                                chunked=(hk < hp)) <= budget

    # Pass 1: weight-resident (single hidden chunk) with a reasonably large row tile.
    if hks[0] == hp:
        min_tm = tms[0] if block_m is not None else min(256, m8)
        for tm in tms:
            if tm < min_tm:
                break
            if fits(tm, hp):
                return tm, hp

    # Pass 2: chunked — keep tm large, shrink the hidden chunk first.
    hks_chunk = [h for h in hks if h < hp] or [min(128, hp)]
    for tm in tms:
        for hk in hks_chunk:
            if fits(tm, hk):
                return tm, hk

    return tms[-1], hks_chunk[-1]  # last resort: smallest tiles


# --------------------------------------------------------------------------- pallas call

@functools.partial(jax.jit, static_argnames=("tm", "hk", "out_dtype"))
def _ffn_pallas(xp, w1p, b1p, w2p, b2p, *, tm, hk, out_dtype):
    mp, kp = xp.shape
    hp = w1p.shape[1]
    npad = w2p.shape[1]
    x_item = xp.dtype.itemsize
    w_item = w1p.dtype.itemsize
    o_item = np.dtype(out_dtype).itemsize
    chunked = hk < hp
    vmem_limit = _vmem_limit_bytes(
        _footprint_bytes(tm, hk, kp, npad, x_item, w_item, o_item, chunked))

    if not chunked:
        # Weight-resident path: 1-D grid over row tiles; constant index maps keep
        # W1/W2/biases in VMEM for the whole kernel (single HBM fetch).
        return pl.pallas_call(
            _ffn_kernel_resident,
            out_shape=jax.ShapeDtypeStruct((mp, npad), out_dtype),
            grid_spec=pltpu.PrefetchScalarGridSpec(
                num_scalar_prefetch=0,
                grid=(mp // tm,),
                in_specs=[
                    pl.BlockSpec((tm, kp), lambda i: (i, 0)),
                    pl.BlockSpec((kp, hp), lambda i: (0, 0)),
                    pl.BlockSpec((1, hp), lambda i: (0, 0)),
                    pl.BlockSpec((hp, npad), lambda i: (0, 0)),
                    pl.BlockSpec((1, npad), lambda i: (0, 0)),
                ],
                out_specs=pl.BlockSpec((tm, npad), lambda i: (i, 0)),
            ),
            compiler_params=pltpu.CompilerParams(
                dimension_semantics=("parallel",),
                vmem_limit_bytes=vmem_limit),
        )(xp, w1p, b1p, w2p, b2p)

    # Chunked path: 2-D grid, hidden (reduction) axis last / "arbitrary".
    return pl.pallas_call(
        _ffn_kernel_chunked,
        out_shape=jax.ShapeDtypeStruct((mp, npad), out_dtype),
        grid_spec=pltpu.PrefetchScalarGridSpec(
            num_scalar_prefetch=0,
            grid=(mp // tm, hp // hk),
            in_specs=[
                pl.BlockSpec((tm, kp), lambda i, k: (i, 0)),
                pl.BlockSpec((kp, hk), lambda i, k: (0, k)),
                pl.BlockSpec((1, hk), lambda i, k: (0, k)),
                pl.BlockSpec((hk, npad), lambda i, k: (k, 0)),
                pl.BlockSpec((1, npad), lambda i, k: (0, 0)),
            ],
            out_specs=pl.BlockSpec((tm, npad), lambda i, k: (i, 0)),
            scratch_shapes=[pltpu.VMEM((tm, npad), jnp.float32)],
        ),
        compiler_params=pltpu.CompilerParams(
            dimension_semantics=("parallel", "arbitrary"),
            vmem_limit_bytes=vmem_limit),
    )(xp, w1p, b1p, w2p, b2p)


# --------------------------------------------------------------------------- user API

class FFNParams(NamedTuple):
    w1p: jax.Array      # (kp, hp)   padded, compute dtype, (in, out) layout (= W1^T)
    b1p: jax.Array      # (1, hp)    f32
    w2p: jax.Array      # (hp, npad) padded, compute dtype
    b2p: jax.Array      # (1, npad)  f32
    input_size: int
    hidden_size: int
    output_size: int


def prepare_ffn_params(w1, b1, w2, b2, *, compute_dtype=jnp.bfloat16) -> FFNParams:
    """Pad/cast weights ONCE (hoisted out of the per-call path).  w1: (in, hidden),
    w2: (hidden, out) — i.e. transposed vs. PyTorch nn.Linear storage."""
    input_size, hidden_size = w1.shape
    output_size = w2.shape[1]
    kp = _round_up(input_size, 128)
    hp = _round_up(hidden_size, 128)
    npad = _round_up(output_size, 128)
    # Zero-padding keeps results exact: padded hidden cols get b1=0 -> ReLU(0)=0,
    # and padded W2 rows are zero.
    w1p = _pad_to(w1, (kp, hp)).astype(compute_dtype)
    w2p = _pad_to(w2, (hp, npad)).astype(compute_dtype)
    b1p = _pad_to(b1.astype(jnp.float32), (hp,)).reshape(1, hp)
    b2p = _pad_to(b2.astype(jnp.float32), (npad,)).reshape(1, npad)
    return FFNParams(w1p, b1p, w2p, b2p, input_size, hidden_size, output_size)


def feed_forward_net_apply(x, params: FFNParams, *, block_m=None, block_h=None):
    """Forward pass of FeedForwardNet with pre-formatted params.  x: (..., input_size)."""
    orig_shape = x.shape
    out_dtype = x.dtype
    x2d = x.reshape(-1, params.input_size)
    m = x2d.shape[0]

    kp, hp = params.w1p.shape
    npad = params.w2p.shape[1]
    compute_dtype = params.w1p.dtype

    x_item = np.dtype(compute_dtype).itemsize
    out_item = np.dtype(out_dtype).itemsize
    budget = _vmem_budget_bytes()
    tm, hk = _select_tiles(m, kp, hp, npad, x_item, x_item, out_item, budget,
                           block_m=block_m, block_h=block_h)
    mp = _round_up(max(m, 1), tm)

    xp = x2d if x2d.dtype == compute_dtype else x2d.astype(compute_dtype)
    if mp != m or kp != params.input_size:
        xp = _pad_to(xp, (mp, kp))

    out = _ffn_pallas(xp, params.w1p, params.b1p, params.w2p, params.b2p,
                      tm=tm, hk=hk, out_dtype=np.dtype(out_dtype))

    if mp != m or npad != params.output_size:
        out = out[:m, :params.output_size]
    return out.reshape(orig_shape[:-1] + (params.output_size,))


def feed_forward_net(x, w1, b1, w2, b2, *, compute_dtype=jnp.bfloat16,
                     block_m=None, block_h=None):
    """Convenience wrapper (prepares params every call; prefer prepare + apply)."""
    params = prepare_ffn_params(w1, b1, w2, b2, compute_dtype=compute_dtype)
    return feed_forward_net_apply(x, params, block_m=block_m, block_h=block_h)


def feed_forward_net_ref(x, w1, b1, w2, b2):
    h = jnp.maximum(jnp.dot(x, w1) + b1, 0.0)
    return jnp.dot(h, w2) + b2


# --------------------------------------------------------------------------- demo / test

if __name__ == "__main__":
    # Small shapes consistent with an NER FFN head: (batch, seq, input_size).
    batch, seq = 2, 8
    input_size, hidden_size, output_size = 32, 64, 16

    key = jax.random.PRNGKey(0)
    kx, kw1, kb1, kw2, kb2 = jax.random.split(key, 5)

    x = jax.random.normal(kx, (batch, seq, input_size), dtype=jnp.float32)
    # nn.Linear-equivalent parameters stored as (in, out) = W^T.
    w1 = jax.random.normal(kw1, (input_size, hidden_size), dtype=jnp.float32) * 0.05
    b1 = jax.random.normal(kb1, (hidden_size,), dtype=jnp.float32) * 0.05
    w2 = jax.random.normal(kw2, (hidden_size, output_size), dtype=jnp.float32) * 0.05
    b2 = jax.random.normal(kb2, (output_size,), dtype=jnp.float32) * 0.05

    y_ref = feed_forward_net_ref(x, w1, b1, w2, b2)

    # 1) Exact f32 compute path, weight-resident single-chunk kernel, params prepared once.
    params_f32 = prepare_ffn_params(w1, b1, w2, b2, compute_dtype=jnp.float32)
    y = jax.block_until_ready(feed_forward_net_apply(x, params_f32))
    assert y.shape == (batch, seq, output_size), y.shape
    assert jnp.allclose(y, y_ref, atol=1e-5, rtol=1e-5), "mismatch vs reference (f32)"

    # 2) Default bf16 compute path (f32 accumulation) via the convenience wrapper.
    y_bf = jax.block_until_ready(feed_forward_net(x, w1, b1, w2, b2))
    assert y_bf.shape == (batch, seq, output_size)
    assert jnp.allclose(y_bf, y_ref, atol=2e-2, rtol=2e-2), "mismatch vs reference (bf16)"

    # 3) Force the chunked/accumulator path (grid > 1 along M and hidden).
    hidden2 = 256
    w1b = jax.random.normal(kw1, (input_size, hidden2), dtype=jnp.float32) * 0.05
    b1b = jax.random.normal(kb1, (hidden2,), dtype=jnp.float32) * 0.05
    w2b = jax.random.normal(kw2, (hidden2, output_size), dtype=jnp.float32) * 0.05
    params2 = prepare_ffn_params(w1b, b1b, w2b, b2, compute_dtype=jnp.float32)
    y2 = jax.block_until_ready(
        feed_forward_net_apply(x, params2, block_m=8, block_h=128))
    y2_ref = feed_forward_net_ref(x, w1b, b1b, w2b, b2)
    assert jnp.allclose(y2, y2_ref, atol=1e-5, rtol=1e-5), "mismatch (chunked path)"

    print("KERNEL_OK")
</pallas_src>

<mosaic_0001>
module attributes {stable_mosaic.version = 11 : i64} {
  func.func @_ffn_kernel_resident(%arg0: i32, %arg1: memref<16x128xf32, #tpu.memory_space<vmem>>, %arg2: memref<128x128xf32, #tpu.memory_space<vmem>>, %arg3: memref<1x128xf32, #tpu.memory_space<vmem>>, %arg4: memref<128x128xf32, #tpu.memory_space<vmem>>, %arg5: memref<1x128xf32, #tpu.memory_space<vmem>>, %arg6: memref<16x128xf32, #tpu.memory_space<vmem>>) attributes {dimension_semantics = [#tpu.dimension_semantics<parallel>], iteration_bounds = array<i64: 1>, scalar_prefetch = 0 : i64, scratch_operands = 0 : i64, tpu.core_type = #tpu.core_type<tc>, window_params = [{transform_indices = @transform_0, window_bounds = array<i64: 16, 128>}, {pipeline_mode = #tpu.pipeline_mode<synchronous>, transform_indices = @transform_1, window_bounds = array<i64: 128, 128>}, {pipeline_mode = #tpu.pipeline_mode<synchronous>, transform_indices = @transform_2, window_bounds = array<i64: 1, 128>}, {pipeline_mode = #tpu.pipeline_mode<synchronous>, transform_indices = @transform_3, window_bounds = array<i64: 128, 128>}, {pipeline_mode = #tpu.pipeline_mode<synchronous>, transform_indices = @transform_4, window_bounds = array<i64: 1, 128>}, {transform_indices = @transform_5, window_bounds = array<i64: 16, 128>}]} {
    %c0 = arith.constant 0 : index
    %c0_0 = arith.constant 0 : index
    %0 = vector.load %arg1[%c0, %c0_0] : memref<16x128xf32, #tpu.memory_space<vmem>>, vector<16x128xf32>
    %c0_1 = arith.constant 0 : index
    %c0_2 = arith.constant 0 : index
    %1 = vector.load %arg2[%c0_1, %c0_2] : memref<128x128xf32, #tpu.memory_space<vmem>>, vector<128x128xf32>
    %cst = arith.constant dense<0.000000e+00> : vector<16x128xf32>
    %2 = tpu.matmul %0, %1, %cst {dimension_numbers = #tpu.dot_dimension_numbers<[1], [0], [0], [1], [0, 0, 1, 1], [], []>} : vector<16x128xf32>, vector<128x128xf32>, vector<16x128xf32> -> vector<16x128xf32>
    %c0_3 = arith.constant 0 : index
    %c0_4 = arith.constant 0 : index
    %3 = vector.load %arg3[%c0_3, %c0_4] : memref<1x128xf32, #tpu.memory_space<vmem>>, vector<1x128xf32>
    %4 = vector.broadcast %3 : vector<1x128xf32> to vector<16x128xf32>
    %5 = arith.addf %2, %4 : vector<16x128xf32>
    %cst_5 = arith.constant 0.000000e+00 : f32
    %6 = vector.broadcast %cst_5 : f32 to vector<16x128xf32>
    %7 = arith.maximumf %5, %6 : vector<16x128xf32>
    %c0_6 = arith.constant 0 : index
    %c0_7 = arith.constant 0 : index
    %8 = vector.load %arg4[%c0_6, %c0_7] : memref<128x128xf32, #tpu.memory_space<vmem>>, vector<128x128xf32>
    %cst_8 = arith.constant dense<0.000000e+00> : vector<16x128xf32>
    %9 = tpu.matmul %7, %8, %cst_8 {dimension_numbers = #tpu.dot_dimension_numbers<[1], [0], [0], [1], [0, 0, 1, 1], [], []>} : vector<16x128xf32>, vector<128x128xf32>, vector<16x128xf32> -> vector<16x128xf32>
    %c0_9 = arith.constant 0 : index
    %c0_10 = arith.constant 0 : index
    %10 = vector.load %arg5[%c0_9, %c0_10] : memref<1x128xf32, #tpu.memory_space<vmem>>, vector<1x128xf32>
    %11 = vector.broadcast %10 : vector<1x128xf32> to vector<16x128xf32>
    %12 = arith.addf %9, %11 : vector<16x128xf32>
    %c0_11 = arith.constant 0 : index
    %c0_12 = arith.constant 0 : index
    %13 = vector.load %arg6[%c0_11, %c0_12] : memref<16x128xf32, #tpu.memory_space<vmem>>, vector<16x128xf32>
    tpu.vector_store %arg6[%c0_11, %c0_12], %12 {strides = array<i32>} : memref<16x128xf32, #tpu.memory_space<vmem>>, vector<16x128xf32>,
    return
  }
  func.func @transform_0(%arg0: i32) -> (i32, i32) {
    %c0_i32 = arith.constant 0 : i32
    %c0_i32_0 = arith.constant 0 : i32
    return %arg0, %c0_i32 : i32, i32
  }
  func.func @transform_1(%arg0: i32) -> (i32, i32) {
    %c0_i32 = arith.constant 0 : i32
    %c0_i32_0 = arith.constant 0 : i32
    %c0_i32_1 = arith.constant 0 : i32
    return %c0_i32, %c0_i32_0 : i32, i32
  }
  func.func @transform_2(%arg0: i32) -> (i32, i32) {
    %c0_i32 = arith.constant 0 : i32
    %c0_i32_0 = arith.constant 0 : i32
    %c0_i32_1 = arith.constant 0 : i32
    return %c0_i32, %c0_i32_0 : i32, i32
  }
  func.func @transform_3(%arg0: i32) -> (i32, i32) {
    %c0_i32 = arith.constant 0 : i32
    %c0_i32_0 = arith.constant 0 : i32
    %c0_i32_1 = arith.constant 0 : i32
    return %c0_i32, %c0_i32_0 : i32, i32
  }
  func.func @transform_4(%arg0: i32) -> (i32, i32) {
    %c0_i32 = arith.constant 0 : i32
    %c0_i32_0 = arith.constant 0 : i32
    %c0_i32_1 = arith.constant 0 : i32
    return %c0_i32, %c0_i32_0 : i32, i32
  }
  func.func @transform_5(%arg0: i32) -> (i32, i32) {
    %c0_i32 = arith.constant 0 : i32
    %c0_i32_0 = arith.constant 0 : i32
    return %arg0, %c0_i32 : i32, i32
  }
}

</mosaic_0001>

<llo_original>
// kernel: _ffn_pallas.1
$region0: #{_ffn_pallas.1}
  #allocation0 [shape = 'u32[]', space=smem, size = 0x4, offset = 0x4, fixed_abs, tag = 'smem constant byte address 0x4 - core index']
  #allocation1 [shape = 'u32[144,128]{1,0:T(1,128)}', space=vmem, size = 0x12000, scoped, tag = 'internal scratch']
  %s0 = inlined_call_operand.hbm [shape: f32[16,128], index: 0, kind: input, shape index: {}]
  %s1 = inlined_call_operand.hbm [shape: f32[128,128], index: 1, kind: input, shape index: {}]
  %s2 = inlined_call_operand.vmem [shape: f32[1,128], index: 2, kind: input, shape index: {}]
  %s3 = inlined_call_operand.hbm [shape: f32[128,128], index: 3, kind: input, shape index: {}]
  %s4 = inlined_call_operand.vmem [shape: f32[1,128], index: 4, kind: input, shape index: {}]
  %s5 = inlined_call_operand.hbm [shape: f32[16,128], index: 5, kind: output, shape index: {}]
  %s6 = sld [smem:[#allocation0]]
  $region42: #{_ffn_pallas.1} parent=0
    _
  %s8 = ssub.s32 1, %s6
  %s9 = scalar_select 0, %s8, %s6
  $region1: #{_ffn_pallas.1} parent=0
    #allocation2 [shape = 'u8[8192]{0}', space=vmem, size = 0x2000, scoped, tag = 'input window, operand 0, single buffered']
    #allocation3 [shape = 's32[1]{0}', space=sflag, size = 0x4, scoped, tag = 'scoped memory for _ffn_pallas.1']
    #allocation4 [shape = 's32[1]{0}', space=sflag, size = 0x4, scoped, tag = 'scoped memory for _ffn_pallas.1']
    #allocation5 [shape = 'u8[65536]{0}', space=vmem, size = 0x10000, scoped, tag = 'input window, operand 1, single buffered']
    #allocation6 [shape = 's32[1]{0}', space=sflag, size = 0x4, scoped, tag = 'scoped memory for _ffn_pallas.1']
    #allocation7 [shape = 'u8[65536]{0}', space=vmem, size = 0x10000, scoped, tag = 'input window, operand 3, single buffered']
    #allocation8 [shape = 'u8[8192]{0}', space=vmem, size = 0x2000, scoped, tag = 'output window, operand 0, single buffered']
    %10 = vsyncpa [#allocation3], 0
    %11 = vsyncpa [#allocation6], 0
    %12 = vsyncpa [#allocation4], 0
    // Predicated region
    $region2: #{_ffn_pallas.1} parent=1 // pred_check
      _
    $region3: #{_ffn_pallas.1} parent=1 // pred_check_branch
      %14 = sbr.rel (0) target = $region5
    $region4: #{_ffn_pallas.1} parent=1 // pred_region
      %s16 = ssub.s32 256, 256
      %17 = vsyncadd [#allocation3], %s16
      %s18 = sshll.u32 [#allocation2], 4
      %s19 = int_to_ptr.vmem [resolvable:$true] %s18
      %24 = dma.hbm_to_vmem [thread:$0]  %s0, 256, %s19, [#allocation3], 128, 128, 8
    $region5: #{_ffn_pallas.1} parent=1 // pred_fallthru
      _
    // Predicated region
    $region6: #{_ffn_pallas.1} parent=1 // pred_check
      _
    $region7: #{_ffn_pallas.1} parent=1 // pred_check_branch
      %26 = sbr.rel (0) target = $region9
    $region8: #{_ffn_pallas.1} parent=1 // pred_region
      %s28 = ssub.s32 2048, 2048
      %29 = vsyncadd [#allocation6], %s28
      %s30 = sshll.u32 [#allocation5], 4
      %s31 = int_to_ptr.vmem [resolvable:$true] %s30
      %36 = dma.hbm_to_vmem [thread:$0]  %s1, 2048, %s31, [#allocation6], 128, 128, 8
    $region9: #{_ffn_pallas.1} parent=1 // pred_fallthru
      _
    // Predicated region
    $region10: #{_ffn_pallas.1} parent=1 // pred_check
      _
    $region11: #{_ffn_pallas.1} parent=1 // pred_check_branch
      %38 = sbr.rel (0) target = $region13
    $region12: #{_ffn_pallas.1} parent=1 // pred_region
      _
    $region13: #{_ffn_pallas.1} parent=1 // pred_fallthru
      _
    // Predicated region
    $region14: #{_ffn_pallas.1} parent=1 // pred_check
      _
    $region15: #{_ffn_pallas.1} parent=1 // pred_check_branch
      %40 = sbr.rel (0) target = $region17
    $region16: #{_ffn_pallas.1} parent=1 // pred_region
      %s42 = ssub.s32 2048, 2048
      %43 = vsyncadd [#allocation6], %s42
      %s44 = sshll.u32 [#allocation7], 4
      %s45 = int_to_ptr.vmem [resolvable:$true] %s44
      %50 = dma.hbm_to_vmem [thread:$0]  %s3, 2048, %s45, [#allocation6], 128, 128, 8
    $region17: #{_ffn_pallas.1} parent=1 // pred_fallthru
      _
    // Predicated region
    $region18: #{_ffn_pallas.1} parent=1 // pred_check
      _
    $region19: #{_ffn_pallas.1} parent=1 // pred_check_branch
      %52 = sbr.rel (0) target = $region21
    $region20: #{_ffn_pallas.1} parent=1 // pred_region
      _
    $region21: #{_ffn_pallas.1} parent=1 // pred_fallthru
      _
    // Predicated region
    $region22: #{_ffn_pallas.1} parent=1 // pred_check
      _
    $region23: #{_ffn_pallas.1} parent=1 // pred_check_branch
      %54 = sbr.rel (0) target = $region25
    $region24: #{_ffn_pallas.1} parent=1 // pred_region
      %55 = dma.done [#allocation3], 256
    $region25: #{_ffn_pallas.1} parent=1 // pred_fallthru
      _
    // Predicated region
    $region26: #{_ffn_pallas.1} parent=1 // pred_check
      _
    $region27: #{_ffn_pallas.1} parent=1 // pred_check_branch
      %57 = sbr.rel (0) target = $region29
    $region28: #{_ffn_pallas.1} parent=1 // pred_region
      %58 = dma.done [#allocation6], 2048
    $region29: #{_ffn_pallas.1} parent=1 // pred_fallthru
      _
    // Predicated region
    $region30: #{_ffn_pallas.1} parent=1 // pred_check
      _
    $region31: #{_ffn_pallas.1} parent=1 // pred_check_branch
      %60 = sbr.rel (0) target = $region33
    $region32: #{_ffn_pallas.1} parent=1 // pred_region
      %61 = dma.done [#allocation6], 2048
    $region33: #{_ffn_pallas.1} parent=1 // pred_fallthru
      _
    %v62 = vld [vmem:[#allocation2] sm:$0xff]
    %v63 = vld [vmem:[#allocation2 + $0x8] sm:$0xff]
    %v64 = vld [vmem:[#allocation5] sm:$0xff]
    %v65 = vld [vmem:[#allocation5 + $0x8] sm:$0xff]
    %v66 = vld [vmem:[#allocation5 + $0x10] sm:$0xff]
    %v67 = vld [vmem:[#allocation5 + $0x18] sm:$0xff]
    %v68 = vld [vmem:[#allocation5 + $0x20] sm:$0xff]
    %v69 = vld [vmem:[#allocation5 + $0x28] sm:$0xff]
    %v70 = vld [vmem:[#allocation5 + $0x30] sm:$0xff]
    %v71 = vld [vmem:[#allocation5 + $0x38] sm:$0xff]
    %v72 = vld [vmem:[#allocation5 + $0x40] sm:$0xff]
    %v73 = vld [vmem:[#allocation5 + $0x48] sm:$0xff]
    %v74 = vld [vmem:[#allocation5 + $0x50] sm:$0xff]
    %v75 = vld [vmem:[#allocation5 + $0x58] sm:$0xff]
    %v76 = vld [vmem:[#allocation5 + $0x60] sm:$0xff]
    %v77 = vld [vmem:[#allocation5 + $0x68] sm:$0xff]
    %v78 = vld [vmem:[#allocation5 + $0x70] sm:$0xff]
    %v79 = vld [vmem:[#allocation5 + $0x78] sm:$0xff]
    %v80 = vld [vmem:[%s2] sm:$0x1]
    %v82 = vlaneseq
    %v83 = vshrl.u32 %v82, 7
    %v84 = vsub.s32 0, %v83
    %v85 = vrot.slane %v80, %v84
    %87 = vmatprep.subr.mxu0 0.0
    %88 = vmatpush1.msra.mxu0 %v64
    %89 = vmatprep.subr.mxu0 0.0
    %90 = vmatpush1.msra.mxu0 %v65
    %91 = vmatprep.subr.mxu0 0.0
    %92 = vmatpush1.msra.mxu0 %v66
    %93 = vmatprep.subr.mxu0 0.0
    %94 = vmatpush1.msra.mxu0 %v67
    %95 = vmatprep.subr.mxu0 0.0
    %96 = vmatpush1.msra.mxu0 %v68
    %97 = vmatprep.subr.mxu0 0.0
    %98 = vmatpush1.msra.mxu0 %v69
    %99 = vmatprep.subr.mxu0 0.0
    %100 = vmatpush1.msra.mxu0 %v70
    %101 = vmatprep.subr.mxu0 0.0
    %102 = vmatpush1.msra.mxu0 %v71
    %103 = vmatprep.subr.mxu0 0.0
    %104 = vmatpush1.msra.mxu0 %v72
    %105 = vmatprep.subr.mxu0 0.0
    %106 = vmatpush1.msra.mxu0 %v73
    %107 = vmatprep.subr.mxu0 0.0
    %108 = vmatpush1.msra.mxu0 %v74
    %109 = vmatprep.subr.mxu0 0.0
    %110 = vmatpush1.msra.mxu0 %v75
    %111 = vmatprep.subr.mxu0 0.0
    %112 = vmatpush1.msra.mxu0 %v76
    %113 = vmatprep.subr.mxu0 0.0
    %114 = vmatpush1.msra.mxu0 %v77
    %115 = vmatprep.subr.mxu0 0.0
    %116 = vmatpush1.msra.mxu0 %v78
    %117 = vmatprep.subr.mxu0 0.0
    %118 = vmatpush1.msra.mxu0 %v79
    %119 = vmatprep.subr.mxu0 0.0
    %120 = vmatpush1.msra.mxu0 0.0
    %121 = vmatprep.subr.mxu0 0.0
    %122 = vmatpush1.msra.mxu0 0.0
    %123 = vmatprep.subr.mxu0 0.0
    %124 = vmatpush1.msra.mxu0 0.0
    %125 = vmatprep.subr.mxu0 0.0
    %126 = vmatpush1.msra.mxu0 0.0
    %127 = vmatprep.subr.mxu0 0.0
    %128 = vmatpush1.msra.mxu0 0.0
    %129 = vmatprep.subr.mxu0 0.0
    %130 = vmatpush1.msra.mxu0 0.0
    %131 = vmatprep.subr.mxu0 0.0
    %132 = vmatpush1.msra.mxu0 0.0
    %133 = vmatprep.subr.mxu0 0.0
    %134 = vmatpush1.msra.mxu0 0.0
    %135 = vmatprep.subr.mxu0 0.0
    %136 = vmatpush1.msra.mxu0 0.0
    %137 = vmatprep.subr.mxu0 0.0
    %138 = vmatpush1.msra.mxu0 0.0
    %139 = vmatprep.subr.mxu0 0.0
    %140 = vmatpush1.msra.mxu0 0.0
    %141 = vmatprep.subr.mxu0 0.0
    %142 = vmatpush1.msra.mxu0 0.0
    %143 = vmatprep.subr.mxu0 0.0
    %144 = vmatpush1.msra.mxu0 0.0
    %145 = vmatprep.subr.mxu0 0.0
    %146 = vmatpush1.msra.mxu0 0.0
    %147 = vmatprep.subr.mxu0 0.0
    %148 = vmatpush1.msra.mxu0 0.0
    %149 = vmatprep.subr.mxu0 0.0
    %150 = vmatpush1.msra.mxu0 0.0
    %151 = vmatprep.mubr.f32.mxu0 0.0
    %152 = vmatmul.mubr.f32.gmra.mrb[0].mxu0 %v62
    %v153 = vpop.f32.mrb[0].mxu0
    %v154 = vadd.f32 %v85, %v153
    %v155 = vpop.f32.mrb[0].mxu0
    %156 = vmatprep.mubr.f32.mxu0 0.0
    %157 = vmatmul.mubr.f32.gmra.mrb[0].mxu0 %v63
    %v158 = vpop.f32.mrb[0].mxu0
    %v159 = vadd.f32 %v85, %v158
    %v160 = vpop.f32.mrb[0].mxu0
    %161 = vdwg.mxu0
    %v162 = vmax.f32 %v154, 0.0
    %v163 = vmax.f32 %v159, 0.0
    %v164 = vld [vmem:[#allocation7] sm:$0xff]
    %v165 = vld [vmem:[#allocation7 + $0x8] sm:$0xff]
    %v166 = vld [vmem:[#allocation7 + $0x10] sm:$0xff]
    %v167 = vld [vmem:[#allocation7 + $0x18] sm:$0xff]
    %v168 = vld [vmem:[#allocation7 + $0x20] sm:$0xff]
    %v169 = vld [vmem:[#allocation7 + $0x28] sm:$0xff]
    %v170 = vld [vmem:[#allocation7 + $0x30] sm:$0xff]
    %v171 = vld [vmem:[#allocation7 + $0x38] sm:$0xff]
    %v172 = vld [vmem:[#allocation7 + $0x40] sm:$0xff]
    %v173 = vld [vmem:[#allocation7 + $0x48] sm:$0xff]
    %v174 = vld [vmem:[#allocation7 + $0x50] sm:$0xff]
    %v175 = vld [vmem:[#allocation7 + $0x58] sm:$0xff]
    %v176 = vld [vmem:[#allocation7 + $0x60] sm:$0xff]
    %v177 = vld [vmem:[#allocation7 + $0x68] sm:$0xff]
    %v178 = vld [vmem:[#allocation7 + $0x70] sm:$0xff]
    %v179 = vld [vmem:[#allocation7 + $0x78] sm:$0xff]
    %v180 = vld [vmem:[%s4] sm:$0x1]
    %v182 = vlaneseq
    %v183 = vshrl.u32 %v182, 7
    %v184 = vsub.s32 0, %v183
    %v185 = vrot.slane %v180, %v184
    %187 = vmatprep.subr.mxu0 0.0
    %188 = vmatpush1.msra.mxu0 %v164
    %189 = vmatprep.subr.mxu0 0.0
    %190 = vmatpush1.msra.mxu0 %v165
    %191 = vmatprep.subr.mxu0 0.0
    %192 = vmatpush1.msra.mxu0 %v166
    %193 = vmatprep.subr.mxu0 0.0
    %194 = vmatpush1.msra.mxu0 %v167
    %195 = vmatprep.subr.mxu0 0.0
    %196 = vmatpush1.msra.mxu0 %v168
    %197 = vmatprep.subr.mxu0 0.0
    %198 = vmatpush1.msra.mxu0 %v169
    %199 = vmatprep.subr.mxu0 0.0
    %200 = vmatpush1.msra.mxu0 %v170
    %201 = vmatprep.subr.mxu0 0.0
    %202 = vmatpush1.msra.mxu0 %v171
    %203 = vmatprep.subr.mxu0 0.0
    %204 = vmatpush1.msra.mxu0 %v172
    %205 = vmatprep.subr.mxu0 0.0
    %206 = vmatpush1.msra.mxu0 %v173
    %207 = vmatprep.subr.mxu0 0.0
    %208 = vmatpush1.msra.mxu0 %v174
    %209 = vmatprep.subr.mxu0 0.0
    %210 = vmatpush1.msra.mxu0 %v175
    %211 = vmatprep.subr.mxu0 0.0
    %212 = vmatpush1.msra.mxu0 %v176
    %213 = vmatprep.subr.mxu0 0.0
    %214 = vmatpush1.msra.mxu0 %v177
    %215 = vmatprep.subr.mxu0 0.0
    %216 = vmatpush1.msra.mxu0 %v178
    %217 = vmatprep.subr.mxu0 0.0
    %218 = vmatpush1.msra.mxu0 %v179
    %219 = vmatprep.subr.mxu0 0.0
    %220 = vmatpush1.msra.mxu0 0.0
    %221 = vmatprep.subr.mxu0 0.0
    %222 = vmatpush1.msra.mxu0 0.0
    %223 = vmatprep.subr.mxu0 0.0
    %224 = vmatpush1.msra.mxu0 0.0
    %225 = vmatprep.subr.mxu0 0.0
    %226 = vmatpush1.msra.mxu0 0.0
    %227 = vmatprep.subr.mxu0 0.0
    %228 = vmatpush1.msra.mxu0 0.0
    %229 = vmatprep.subr.mxu0 0.0
    %230 = vmatpush1.msra.mxu0 0.0
    %231 = vmatprep.subr.mxu0 0.0
    %232 = vmatpush1.msra.mxu0 0.0
    %233 = vmatprep.subr.mxu0 0.0
    %234 = vmatpush1.msra.mxu0 0.0
    %235 = vmatprep.subr.mxu0 0.0
    %236 = vmatpush1.msra.mxu0 0.0
    %237 = vmatprep.subr.mxu0 0.0
    %238 = vmatpush1.msra.mxu0 0.0
    %239 = vmatprep.subr.mxu0 0.0
    %240 = vmatpush1.msra.mxu0 0.0
    %241 = vmatprep.subr.mxu0 0.0
    %242 = vmatpush1.msra.mxu0 0.0
    %243 = vmatprep.subr.mxu0 0.0
    %244 = vmatpush1.msra.mxu0 0.0
    %245 = vmatprep.subr.mxu0 0.0
    %246 = vmatpush1.msra.mxu0 0.0
    %247 = vmatprep.subr.mxu0 0.0
    %248 = vmatpush1.msra.mxu0 0.0
    %249 = vmatprep.subr.mxu0 0.0
    %250 = vmatpush1.msra.mxu0 0.0
    %251 = vmatprep.mubr.f32.mxu0 0.0
    %252 = vmatmul.mubr.f32.gmra.mrb[0].mxu0 %v162
    %v253 = vpop.f32.mrb[0].mxu0
    %v254 = vadd.f32 %v185, %v253
    %v255 = vpop.f32.mrb[0].mxu0
    %256 = vmatprep.mubr.f32.mxu0 0.0
    %257 = vmatmul.mubr.f32.gmra.mrb[0].mxu0 %v163
    %v258 = vpop.f32.mrb[0].mxu0
    %v259 = vadd.f32 %v185, %v258
    %v260 = vpop.f32.mrb[0].mxu0
    %261 = vdwg.mxu0
    %262 = vst [vmem:[#allocation8] sm:$0xff] %v254
    %263 = vst [vmem:[#allocation8 + $0x8] sm:$0xff] %v259
    // Predicated region
    $region34: #{_ffn_pallas.1} parent=1 // pred_check
      _
    $region35: #{_ffn_pallas.1} parent=1 // pred_check_branch
      %265 = sbr.rel (0) target = $region37
    $region36: #{_ffn_pallas.1} parent=1 // pred_region
      %s267 = ssub.s32 256, 256
      %268 = vsyncadd [#allocation4], %s267
      %s269 = sshll.u32 [#allocation8], 4
      %s270 = int_to_ptr.vmem [resolvable:$true] %s269
      %275 = dma.vmem_to_hbm [thread:$0]  %s270, 256, %s5, [#allocation4], 128, 128, 8
    $region37: #{_ffn_pallas.1} parent=1 // pred_fallthru
      _
    // Predicated region
    $region38: #{_ffn_pallas.1} parent=1 // pred_check
      _
    $region39: #{_ffn_pallas.1} parent=1 // pred_check_branch
      %277 = sbr.rel (0) target = $region41
    $region40: #{_ffn_pallas.1} parent=1 // pred_region
      %278 = dma.done [#allocation4], 256
    $region41: #{_ffn_pallas.1} parent=1 // pred_fallthru
      _
    %279 = vsyncpa [#allocation3], 1
    %280 = vsyncpa [#allocation6], 1
    %281 = vsyncpa [#allocation4], 1

</llo_original>
